<compile_context>
chip_gen: v5e
topology: v5e:2x2
jax: 0.10.0
libtpu: 0.0.40
codegen_flags: <defaults>
</compile_context>

<pallas_src>
import functools

import jax
import jax.numpy as jnp
from jax.experimental import pallas as pl
from jax.experimental.pallas import tpu as pltpu


def _round_up(x: int, m: int) -> int:
    return (x + m - 1) // m * m


def _fused_mlp_kernel(*refs, num_linear: int):
    """refs = (x_ref, w0, b0, w1, b1, ..., w_{n-1}, b_{n-1}, o_ref).

    x:  (TB, F0p)          f32   (batch tile, padded features)
    wl: (F_lp, F_{l+1}p)   f32   (already transposed from torch (out, in),
                                  zero-padded to multiples of 128)
    bl: (1,   F_{l+1}p)    f32   (zero-padded)
    o:  (TB, F_np)         f32
    ReLU on every linear except the last one; intermediates live in vregs.
    """
    x_ref = refs[0]
    o_ref = refs[-1]
    wb = refs[1:-1]

    h = x_ref[...]
    for l in range(num_linear):
        w = wb[2 * l][...]
        b = wb[2 * l + 1][...]
        h = jnp.dot(h, w, preferred_element_type=jnp.float32) + b
        if l < num_linear - 1:
            h = jnp.maximum(h, 0.0)
    o_ref[...] = h.astype(o_ref.dtype)


def fused_mlp_pallas(x_padded, padded_params, *, block_b):
    """Whole MLP forward in a single Pallas kernel.

    x_padded:       (Bp, F0p) with Bp % block_b == 0, F0p % 128 == 0.
    padded_params:  list of (w_t (Fi_p, Fo_p), b (1, Fo_p)), all dims %128==0.
    """
    Bp, F0p = x_padded.shape
    num_linear = len(padded_params)
    Fout_p = padded_params[-1][0].shape[1]

    inputs = [x_padded]
    # Batch tile of x moves with the grid; lane-dense (128-multiple) features.
    in_specs = [pl.BlockSpec((block_b, F0p), lambda i: (i, 0))]
    for (w_p, b_p) in padded_params:
        fi, fo = w_p.shape
        inputs.append(w_p)
        # Constant block index: weights fetched once, VMEM-resident across
        # all grid steps.
        in_specs.append(pl.BlockSpec((fi, fo), lambda i: (0, 0)))
        inputs.append(b_p)
        in_specs.append(pl.BlockSpec((1, fo), lambda i: (0, 0)))

    kernel = functools.partial(_fused_mlp_kernel, num_linear=num_linear)
    return pl.pallas_call(
        kernel,
        out_shape=jax.ShapeDtypeStruct((Bp, Fout_p), jnp.float32),
        grid=(Bp // block_b,),
        in_specs=in_specs,
        out_specs=pl.BlockSpec((block_b, Fout_p), lambda i: (i, 0)),
        compiler_params=pltpu.CompilerParams(
            # Batch axis is embarrassingly parallel -> shards across v7x's
            # two TensorCores; no-op on single-TC v5e/v6e.
            dimension_semantics=("parallel",),
        ),
    )(*inputs)


def pad_params(params):
    """Zero-pad each (in,out) weight and bias to multiples of 128.

    Padded entries are exactly zero so ReLU and subsequent layers see no
    contribution from the padding; padded output columns are sliced off in
    the wrapper.
    """
    padded = []
    for (w_t, b) in params:
        fi, fo = w_t.shape
        fi_p, fo_p = _round_up(fi, 128), _round_up(fo, 128)
        w_p = jnp.zeros((fi_p, fo_p), jnp.float32).at[:fi, :fo].set(w_t)
        b_p = jnp.zeros((1, fo_p), jnp.float32).at[0, :fo].set(b)
        padded.append((w_p, b_p))
    return padded


def _dnn_forward_impl(padded_params, state, out_features):
    """Matches DNN.forward: ReLU on layers 0..NUM_LAYERS-1, last layer linear."""
    B, Fin = state.shape
    F0p = padded_params[0][0].shape[0]

    # Batch tile: at least 8 sublanes, at most 128 rows per grid step.
    block_b = min(128, _round_up(B, 8))
    Bp = _round_up(max(B, block_b), block_b)

    # Pad batch rows and input features with zeros (discarded on slice-out).
    x = jnp.zeros((Bp, F0p), jnp.float32).at[:B, :Fin].set(
        state.astype(jnp.float32))

    out_p = fused_mlp_pallas(x, padded_params, block_b=block_b)
    return out_p[:B, :out_features]


dnn_forward = jax.jit(_dnn_forward_impl, static_argnames=("out_features",))


def init_dnn_params(key, size_layers):
    """Deterministic init mimicking nn.Linear (uniform +/- 1/sqrt(fan_in)).

    Returns list of (w_t, b) with w_t of shape (in, out) — i.e. the PyTorch
    (out, in) weight pre-transposed so each matmul is lane-dense on the
    output-feature axis.
    """
    params = []
    n_linear = len(size_layers) - 1
    keys = jax.random.split(key, 2 * n_linear)
    for l in range(n_linear):
        fin, fout = size_layers[l], size_layers[l + 1]
        bound = 1.0 / jnp.sqrt(float(fin))
        w = jax.random.uniform(keys[2 * l], (fout, fin), jnp.float32,
                               minval=-bound, maxval=bound)
        b = jax.random.uniform(keys[2 * l + 1], (fout,), jnp.float32,
                               minval=-bound, maxval=bound)
        params.append((w.T, b))  # store transposed (in, out)
    return params


if __name__ == "__main__":
    # Module config: NUM_LAYERS hidden relu layers + 1 output layer,
    # SIZE_LAYERS has NUM_LAYERS + 2 entries.
    NUM_LAYERS = 2
    SIZE_LAYERS = [32, 64, 64, 16]

    key = jax.random.PRNGKey(0)
    k_param, k_x = jax.random.split(key)
    params = init_dnn_params(k_param, SIZE_LAYERS)
    padded_params = pad_params(params)

    batch = 2
    state = jax.random.normal(k_x, (batch, SIZE_LAYERS[0]), jnp.float32)

    out = dnn_forward(padded_params, state, out_features=SIZE_LAYERS[-1])
    jax.block_until_ready(out)
    assert out.shape == (batch, SIZE_LAYERS[-1])

    # Pure-JAX reference check against the UNPADDED params (same math).
    ref = state
    for i, (w_t, b) in enumerate(params):
        ref = ref @ w_t + b
        if i < len(params) - 1:
            ref = jnp.maximum(ref, 0.0)
    assert jnp.allclose(out, ref, atol=1e-5, rtol=1e-5)

    # Also exercise a "real" batch (amortized-launch path, multiple grid
    # steps) to confirm the batch-tiled variant is correct.
    big_state = jax.random.normal(jax.random.PRNGKey(1), (300, SIZE_LAYERS[0]),
                                  jnp.float32)
    big_out = dnn_forward(padded_params, big_state,
                          out_features=SIZE_LAYERS[-1])
    jax.block_until_ready(big_out)
    ref_big = big_state
    for i, (w_t, b) in enumerate(params):
        ref_big = ref_big @ w_t + b
        if i < len(params) - 1:
            ref_big = jnp.maximum(ref_big, 0.0)
    assert big_out.shape == (300, SIZE_LAYERS[-1])
    assert jnp.allclose(big_out, ref_big, atol=1e-4, rtol=1e-5)

    print("KERNEL_OK")
</pallas_src>

<mosaic_0001>
module attributes {stable_mosaic.version = 11 : i64} {
  func.func @_fused_mlp_kernel(%arg0: i32, %arg1: memref<8x128xf32, #tpu.memory_space<vmem>>, %arg2: memref<128x128xf32, #tpu.memory_space<vmem>>, %arg3: memref<1x128xf32, #tpu.memory_space<vmem>>, %arg4: memref<128x128xf32, #tpu.memory_space<vmem>>, %arg5: memref<1x128xf32, #tpu.memory_space<vmem>>, %arg6: memref<128x128xf32, #tpu.memory_space<vmem>>, %arg7: memref<1x128xf32, #tpu.memory_space<vmem>>, %arg8: memref<8x128xf32, #tpu.memory_space<vmem>>) attributes {dimension_semantics = [#tpu.dimension_semantics<parallel>], iteration_bounds = array<i64: 1>, scalar_prefetch = 0 : i64, scratch_operands = 0 : i64, tpu.core_type = #tpu.core_type<tc>, window_params = [{transform_indices = @transform_0, window_bounds = array<i64: 8, 128>}, {pipeline_mode = #tpu.pipeline_mode<synchronous>, transform_indices = @transform_1, window_bounds = array<i64: 128, 128>}, {pipeline_mode = #tpu.pipeline_mode<synchronous>, transform_indices = @transform_2, window_bounds = array<i64: 1, 128>}, {pipeline_mode = #tpu.pipeline_mode<synchronous>, transform_indices = @transform_3, window_bounds = array<i64: 128, 128>}, {pipeline_mode = #tpu.pipeline_mode<synchronous>, transform_indices = @transform_4, window_bounds = array<i64: 1, 128>}, {pipeline_mode = #tpu.pipeline_mode<synchronous>, transform_indices = @transform_5, window_bounds = array<i64: 128, 128>}, {pipeline_mode = #tpu.pipeline_mode<synchronous>, transform_indices = @transform_6, window_bounds = array<i64: 1, 128>}, {transform_indices = @transform_7, window_bounds = array<i64: 8, 128>}]} {
    %c0 = arith.constant 0 : index
    %c0_0 = arith.constant 0 : index
    %0 = vector.load %arg1[%c0, %c0_0] : memref<8x128xf32, #tpu.memory_space<vmem>>, vector<8x128xf32>
    %c0_1 = arith.constant 0 : index
    %c0_2 = arith.constant 0 : index
    %1 = vector.load %arg2[%c0_1, %c0_2] : memref<128x128xf32, #tpu.memory_space<vmem>>, vector<128x128xf32>
    %c0_3 = arith.constant 0 : index
    %c0_4 = arith.constant 0 : index
    %2 = vector.load %arg3[%c0_3, %c0_4] : memref<1x128xf32, #tpu.memory_space<vmem>>, vector<1x128xf32>
    %cst = arith.constant dense<0.000000e+00> : vector<8x128xf32>
    %3 = tpu.matmul %0, %1, %cst {dimension_numbers = #tpu.dot_dimension_numbers<[1], [0], [0], [1], [0, 0, 1, 1], [], []>} : vector<8x128xf32>, vector<128x128xf32>, vector<8x128xf32> -> vector<8x128xf32>
    %4 = vector.broadcast %2 : vector<1x128xf32> to vector<8x128xf32>
    %5 = arith.addf %3, %4 : vector<8x128xf32>
    %cst_5 = arith.constant 0.000000e+00 : f32
    %6 = vector.broadcast %cst_5 : f32 to vector<8x128xf32>
    %7 = arith.maximumf %5, %6 : vector<8x128xf32>
    %c0_6 = arith.constant 0 : index
    %c0_7 = arith.constant 0 : index
    %8 = vector.load %arg4[%c0_6, %c0_7] : memref<128x128xf32, #tpu.memory_space<vmem>>, vector<128x128xf32>
    %c0_8 = arith.constant 0 : index
    %c0_9 = arith.constant 0 : index
    %9 = vector.load %arg5[%c0_8, %c0_9] : memref<1x128xf32, #tpu.memory_space<vmem>>, vector<1x128xf32>
    %cst_10 = arith.constant dense<0.000000e+00> : vector<8x128xf32>
    %10 = tpu.matmul %7, %8, %cst_10 {dimension_numbers = #tpu.dot_dimension_numbers<[1], [0], [0], [1], [0, 0, 1, 1], [], []>} : vector<8x128xf32>, vector<128x128xf32>, vector<8x128xf32> -> vector<8x128xf32>
    %11 = vector.broadcast %9 : vector<1x128xf32> to vector<8x128xf32>
    %12 = arith.addf %10, %11 : vector<8x128xf32>
    %cst_11 = arith.constant 0.000000e+00 : f32
    %13 = vector.broadcast %cst_11 : f32 to vector<8x128xf32>
    %14 = arith.maximumf %12, %13 : vector<8x128xf32>
    %c0_12 = arith.constant 0 : index
    %c0_13 = arith.constant 0 : index
    %15 = vector.load %arg6[%c0_12, %c0_13] : memref<128x128xf32, #tpu.memory_space<vmem>>, vector<128x128xf32>
    %c0_14 = arith.constant 0 : index
    %c0_15 = arith.constant 0 : index
    %16 = vector.load %arg7[%c0_14, %c0_15] : memref<1x128xf32, #tpu.memory_space<vmem>>, vector<1x128xf32>
    %cst_16 = arith.constant dense<0.000000e+00> : vector<8x128xf32>
    %17 = tpu.matmul %14, %15, %cst_16 {dimension_numbers = #tpu.dot_dimension_numbers<[1], [0], [0], [1], [0, 0, 1, 1], [], []>} : vector<8x128xf32>, vector<128x128xf32>, vector<8x128xf32> -> vector<8x128xf32>
    %18 = vector.broadcast %16 : vector<1x128xf32> to vector<8x128xf32>
    %19 = arith.addf %17, %18 : vector<8x128xf32>
    %c0_17 = arith.constant 0 : index
    %c0_18 = arith.constant 0 : index
    %20 = vector.load %arg8[%c0_17, %c0_18] : memref<8x128xf32, #tpu.memory_space<vmem>>, vector<8x128xf32>
    tpu.vector_store %arg8[%c0_17, %c0_18], %19 {strides = array<i32>} : memref<8x128xf32, #tpu.memory_space<vmem>>, vector<8x128xf32>,
    return
  }
  func.func @transform_0(%arg0: i32) -> (i32, i32) {
    %c0_i32 = arith.constant 0 : i32
    %c0_i32_0 = arith.constant 0 : i32
    return %arg0, %c0_i32 : i32, i32
  }
  func.func @transform_1(%arg0: i32) -> (i32, i32) {
    %c0_i32 = arith.constant 0 : i32
    %c0_i32_0 = arith.constant 0 : i32
    %c0_i32_1 = arith.constant 0 : i32
    return %c0_i32, %c0_i32_0 : i32, i32
  }
  func.func @transform_2(%arg0: i32) -> (i32, i32) {
    %c0_i32 = arith.constant 0 : i32
    %c0_i32_0 = arith.constant 0 : i32
    %c0_i32_1 = arith.constant 0 : i32
    return %c0_i32, %c0_i32_0 : i32, i32
  }
  func.func @transform_3(%arg0: i32) -> (i32, i32) {
    %c0_i32 = arith.constant 0 : i32
    %c0_i32_0 = arith.constant 0 : i32
    %c0_i32_1 = arith.constant 0 : i32
    return %c0_i32, %c0_i32_0 : i32, i32
  }
  func.func @transform_4(%arg0: i32) -> (i32, i32) {
    %c0_i32 = arith.constant 0 : i32
    %c0_i32_0 = arith.constant 0 : i32
    %c0_i32_1 = arith.constant 0 : i32
    return %c0_i32, %c0_i32_0 : i32, i32
  }
  func.func @transform_5(%arg0: i32) -> (i32, i32) {
    %c0_i32 = arith.constant 0 : i32
    %c0_i32_0 = arith.constant 0 : i32
    %c0_i32_1 = arith.constant 0 : i32
    return %c0_i32, %c0_i32_0 : i32, i32
  }
  func.func @transform_6(%arg0: i32) -> (i32, i32) {
    %c0_i32 = arith.constant 0 : i32
    %c0_i32_0 = arith.constant 0 : i32
    %c0_i32_1 = arith.constant 0 : i32
    return %c0_i32, %c0_i32_0 : i32, i32
  }
  func.func @transform_7(%arg0: i32) -> (i32, i32) {
    %c0_i32 = arith.constant 0 : i32
    %c0_i32_0 = arith.constant 0 : i32
    return %arg0, %c0_i32 : i32, i32
  }
}

</mosaic_0001>

<llo_original>
// kernel: _dnn_forward_impl.1
$region0: #{_dnn_forward_impl.1}
  #allocation0 [shape = 'u32[]', space=smem, size = 0x4, offset = 0x4, fixed_abs, tag = 'smem constant byte address 0x4 - core index']
  #allocation1 [shape = 'u32[72,128]{1,0:T(1,128)}', space=vmem, size = 0x9000, scoped, tag = 'internal scratch']
  %s0 = inlined_call_operand.vmem [shape: f32[8,128], index: 0, kind: input, shape index: {}]
  %s1 = inlined_call_operand.hbm [shape: f32[128,128], index: 1, kind: input, shape index: {}]
  %s2 = inlined_call_operand.vmem [shape: f32[1,128], index: 2, kind: input, shape index: {}]
  %s3 = inlined_call_operand.hbm [shape: f32[128,128], index: 3, kind: input, shape index: {}]
  %s4 = inlined_call_operand.vmem [shape: f32[1,128], index: 4, kind: input, shape index: {}]
  %s5 = inlined_call_operand.hbm [shape: f32[128,128], index: 5, kind: input, shape index: {}]
  %s6 = inlined_call_operand.vmem [shape: f32[1,128], index: 6, kind: input, shape index: {}]
  %s7 = inlined_call_operand.vmem [shape: f32[8,128], index: 7, kind: output, shape index: {}]
  %s8 = sld [smem:[#allocation0]]
  $region50: #{_dnn_forward_impl.1} parent=0
    _
  %s10 = ssub.s32 1, %s8
  %s11 = scalar_select 0, %s10, %s8
  $region1: #{_dnn_forward_impl.1} parent=0
    #allocation2 [shape = 'u8[65536]{0}', space=vmem, size = 0x10000, scoped, tag = 'input window, operand 1, single buffered']
    #allocation3 [shape = 's32[1]{0}', space=sflag, size = 0x4, scoped, tag = 'scoped memory for _dnn_forward_impl.1']
    #allocation4 [shape = 'u8[65536]{0}', space=vmem, size = 0x10000, scoped, tag = 'input window, operand 3, single buffered']
    #allocation5 [shape = 's32[1]{0}', space=sflag, size = 0x4, scoped, tag = 'scoped memory for _dnn_forward_impl.1']
    #allocation6 [shape = 'u8[65536]{0}', space=vmem, size = 0x10000, scoped, tag = 'input window, operand 5, single buffered']
    %12 = vsyncpa [#allocation3], 0
    %13 = vsyncpa [#allocation5], 0
    // Predicated region
    $region2: #{_dnn_forward_impl.1} parent=1 // pred_check
      _
    $region3: #{_dnn_forward_impl.1} parent=1 // pred_check_branch
      %15 = sbr.rel (0) target = $region5
    $region4: #{_dnn_forward_impl.1} parent=1 // pred_region
      _
    $region5: #{_dnn_forward_impl.1} parent=1 // pred_fallthru
      _
    // Predicated region
    $region6: #{_dnn_forward_impl.1} parent=1 // pred_check
      _
    $region7: #{_dnn_forward_impl.1} parent=1 // pred_check_branch
      %17 = sbr.rel (0) target = $region9
    $region8: #{_dnn_forward_impl.1} parent=1 // pred_region
      %19 = vsyncadd [#allocation3], 0
      %s20 = sshll.u32 %s1, 4
      %s21 = int_to_ptr.hbm [resolvable:$true] %s20
      %s22 = sshll.u32 [#allocation2], 4
      %s23 = int_to_ptr.vmem [resolvable:$true] %s22
      %28 = dma.hbm_to_vmem [thread:$0]  %s21, 2048, %s23, [#allocation3], 128, 128, 8
    $region9: #{_dnn_forward_impl.1} parent=1 // pred_fallthru
      _
    // Predicated region
    $region10: #{_dnn_forward_impl.1} parent=1 // pred_check
      _
    $region11: #{_dnn_forward_impl.1} parent=1 // pred_check_branch
      %30 = sbr.rel (0) target = $region13
    $region12: #{_dnn_forward_impl.1} parent=1 // pred_region
      _
    $region13: #{_dnn_forward_impl.1} parent=1 // pred_fallthru
      _
    // Predicated region
    $region14: #{_dnn_forward_impl.1} parent=1 // pred_check
      _
    $region15: #{_dnn_forward_impl.1} parent=1 // pred_check_branch
      %32 = sbr.rel (0) target = $region17
    $region16: #{_dnn_forward_impl.1} parent=1 // pred_region
      %34 = vsyncadd [#allocation5], 0
      %s35 = sshll.u32 %s3, 4
      %s36 = int_to_ptr.hbm [resolvable:$true] %s35
      %s37 = sshll.u32 [#allocation4], 4
      %s38 = int_to_ptr.vmem [resolvable:$true] %s37
      %43 = dma.hbm_to_vmem [thread:$0]  %s36, 2048, %s38, [#allocation5], 128, 128, 8
    $region17: #{_dnn_forward_impl.1} parent=1 // pred_fallthru
      _
    // Predicated region
    $region18: #{_dnn_forward_impl.1} parent=1 // pred_check
      _
    $region19: #{_dnn_forward_impl.1} parent=1 // pred_check_branch
      %45 = sbr.rel (0) target = $region21
    $region20: #{_dnn_forward_impl.1} parent=1 // pred_region
      _
    $region21: #{_dnn_forward_impl.1} parent=1 // pred_fallthru
      _
    // Predicated region
    $region22: #{_dnn_forward_impl.1} parent=1 // pred_check
      _
    $region23: #{_dnn_forward_impl.1} parent=1 // pred_check_branch
      %47 = sbr.rel (0) target = $region25
    $region24: #{_dnn_forward_impl.1} parent=1 // pred_region
      %49 = vsyncadd [#allocation5], 0
      %s50 = sshll.u32 %s5, 4
      %s51 = int_to_ptr.hbm [resolvable:$true] %s50
      %s52 = sshll.u32 [#allocation6], 4
      %s53 = int_to_ptr.vmem [resolvable:$true] %s52
      %58 = dma.hbm_to_vmem [thread:$0]  %s51, 2048, %s53, [#allocation5], 128, 128, 8
    $region25: #{_dnn_forward_impl.1} parent=1 // pred_fallthru
      _
    // Predicated region
    $region26: #{_dnn_forward_impl.1} parent=1 // pred_check
      _
    $region27: #{_dnn_forward_impl.1} parent=1 // pred_check_branch
      %60 = sbr.rel (0) target = $region29
    $region28: #{_dnn_forward_impl.1} parent=1 // pred_region
      _
    $region29: #{_dnn_forward_impl.1} parent=1 // pred_fallthru
      _
    // Predicated region
    $region30: #{_dnn_forward_impl.1} parent=1 // pred_check
      _
    $region31: #{_dnn_forward_impl.1} parent=1 // pred_check_branch
      %62 = sbr.rel (0) target = $region33
    $region32: #{_dnn_forward_impl.1} parent=1 // pred_region
      %64 = dma.done [#allocation3], 2048
    $region33: #{_dnn_forward_impl.1} parent=1 // pred_fallthru
      _
    // Predicated region
    $region34: #{_dnn_forward_impl.1} parent=1 // pred_check
      _
    $region35: #{_dnn_forward_impl.1} parent=1 // pred_check_branch
      %66 = sbr.rel (0) target = $region37
    $region36: #{_dnn_forward_impl.1} parent=1 // pred_region
      %68 = dma.done [#allocation5], 2048
    $region37: #{_dnn_forward_impl.1} parent=1 // pred_fallthru
      _
    // Predicated region
    $region38: #{_dnn_forward_impl.1} parent=1 // pred_check
      _
    $region39: #{_dnn_forward_impl.1} parent=1 // pred_check_branch
      %70 = sbr.rel (0) target = $region41
    $region40: #{_dnn_forward_impl.1} parent=1 // pred_region
      %72 = dma.done [#allocation5], 2048
    $region41: #{_dnn_forward_impl.1} parent=1 // pred_fallthru
      _
    %v73 = vld [vmem:[%s0] sm:$0xff]
    %v74 = vld [vmem:[#allocation2] sm:$0xff]
    %v75 = vld [vmem:[#allocation2 + $0x8] sm:$0xff]
    %v76 = vld [vmem:[#allocation2 + $0x10] sm:$0xff]
    %v77 = vld [vmem:[#allocation2 + $0x18] sm:$0xff]
    %v78 = vld [vmem:[#allocation2 + $0x20] sm:$0xff]
    %v79 = vld [vmem:[#allocation2 + $0x28] sm:$0xff]
    %v80 = vld [vmem:[#allocation2 + $0x30] sm:$0xff]
    %v81 = vld [vmem:[#allocation2 + $0x38] sm:$0xff]
    %v82 = vld [vmem:[#allocation2 + $0x40] sm:$0xff]
    %v83 = vld [vmem:[#allocation2 + $0x48] sm:$0xff]
    %v84 = vld [vmem:[#allocation2 + $0x50] sm:$0xff]
    %v85 = vld [vmem:[#allocation2 + $0x58] sm:$0xff]
    %v86 = vld [vmem:[#allocation2 + $0x60] sm:$0xff]
    %v87 = vld [vmem:[#allocation2 + $0x68] sm:$0xff]
    %v88 = vld [vmem:[#allocation2 + $0x70] sm:$0xff]
    %v89 = vld [vmem:[#allocation2 + $0x78] sm:$0xff]
    %v90 = vld [vmem:[%s2] sm:$0x1]
    %v92 = vperm.slane %v90, 0
    %94 = vmatpush.msra.mxu0 %v89
    %95 = vmatpush.msra.mxu0 %v88
    %96 = vmatpush.msra.mxu0 %v87
    %97 = vmatpush.msra.mxu0 %v86
    %98 = vmatpush.msra.mxu0 %v85
    %99 = vmatpush.msra.mxu0 %v84
    %100 = vmatpush.msra.mxu0 %v83
    %101 = vmatpush.msra.mxu0 %v82
    %102 = vmatpush.msra.mxu0 %v81
    %103 = vmatpush.msra.mxu0 %v80
    %104 = vmatpush.msra.mxu0 %v79
    %105 = vmatpush.msra.mxu0 %v78
    %106 = vmatpush.msra.mxu0 %v77
    %107 = vmatpush.msra.mxu0 %v76
    %108 = vmatpush.msra.mxu0 %v75
    %109 = vmatpush.msra.mxu0 %v74
    %110 = vmatmul.f32.gmra.mxu0 %v73
    %v111 = vpop.f32.mrf.mxu0
    %v112 = vadd.f32 %v92, %v111
    %113 = vdwg.mxu0
    %v114 = vmax.f32 %v112, 0.0
    %v115 = vld [vmem:[#allocation4] sm:$0xff]
    %v116 = vld [vmem:[#allocation4 + $0x8] sm:$0xff]
    %v117 = vld [vmem:[#allocation4 + $0x10] sm:$0xff]
    %v118 = vld [vmem:[#allocation4 + $0x18] sm:$0xff]
    %v119 = vld [vmem:[#allocation4 + $0x20] sm:$0xff]
    %v120 = vld [vmem:[#allocation4 + $0x28] sm:$0xff]
    %v121 = vld [vmem:[#allocation4 + $0x30] sm:$0xff]
    %v122 = vld [vmem:[#allocation4 + $0x38] sm:$0xff]
    %v123 = vld [vmem:[#allocation4 + $0x40] sm:$0xff]
    %v124 = vld [vmem:[#allocation4 + $0x48] sm:$0xff]
    %v125 = vld [vmem:[#allocation4 + $0x50] sm:$0xff]
    %v126 = vld [vmem:[#allocation4 + $0x58] sm:$0xff]
    %v127 = vld [vmem:[#allocation4 + $0x60] sm:$0xff]
    %v128 = vld [vmem:[#allocation4 + $0x68] sm:$0xff]
    %v129 = vld [vmem:[#allocation4 + $0x70] sm:$0xff]
    %v130 = vld [vmem:[#allocation4 + $0x78] sm:$0xff]
    %v131 = vld [vmem:[%s4] sm:$0x1]
    %v133 = vperm.slane %v131, 0
    %135 = vmatpush.msra.mxu0 %v130
    %136 = vmatpush.msra.mxu0 %v129
    %137 = vmatpush.msra.mxu0 %v128
    %138 = vmatpush.msra.mxu0 %v127
    %139 = vmatpush.msra.mxu0 %v126
    %140 = vmatpush.msra.mxu0 %v125
    %141 = vmatpush.msra.mxu0 %v124
    %142 = vmatpush.msra.mxu0 %v123
    %143 = vmatpush.msra.mxu0 %v122
    %144 = vmatpush.msra.mxu0 %v121
    %145 = vmatpush.msra.mxu0 %v120
    %146 = vmatpush.msra.mxu0 %v119
    %147 = vmatpush.msra.mxu0 %v118
    %148 = vmatpush.msra.mxu0 %v117
    %149 = vmatpush.msra.mxu0 %v116
    %150 = vmatpush.msra.mxu0 %v115
    %151 = vmatmul.f32.gmra.mxu0 %v114
    %v152 = vpop.f32.mrf.mxu0
    %v153 = vadd.f32 %v133, %v152
    %154 = vdwg.mxu0
    %v155 = vmax.f32 %v153, 0.0
    %v156 = vld [vmem:[#allocation6] sm:$0xff]
    %v157 = vld [vmem:[#allocation6 + $0x8] sm:$0xff]
    %v158 = vld [vmem:[#allocation6 + $0x10] sm:$0xff]
    %v159 = vld [vmem:[#allocation6 + $0x18] sm:$0xff]
    %v160 = vld [vmem:[#allocation6 + $0x20] sm:$0xff]
    %v161 = vld [vmem:[#allocation6 + $0x28] sm:$0xff]
    %v162 = vld [vmem:[#allocation6 + $0x30] sm:$0xff]
    %v163 = vld [vmem:[#allocation6 + $0x38] sm:$0xff]
    %v164 = vld [vmem:[#allocation6 + $0x40] sm:$0xff]
    %v165 = vld [vmem:[#allocation6 + $0x48] sm:$0xff]
    %v166 = vld [vmem:[#allocation6 + $0x50] sm:$0xff]
    %v167 = vld [vmem:[#allocation6 + $0x58] sm:$0xff]
    %v168 = vld [vmem:[#allocation6 + $0x60] sm:$0xff]
    %v169 = vld [vmem:[#allocation6 + $0x68] sm:$0xff]
    %v170 = vld [vmem:[#allocation6 + $0x70] sm:$0xff]
    %v171 = vld [vmem:[#allocation6 + $0x78] sm:$0xff]
    %v172 = vld [vmem:[%s6] sm:$0x1]
    %v174 = vperm.slane %v172, 0
    %176 = vmatpush.msra.mxu0 %v171
    %177 = vmatpush.msra.mxu0 %v170
    %178 = vmatpush.msra.mxu0 %v169
    %179 = vmatpush.msra.mxu0 %v168
    %180 = vmatpush.msra.mxu0 %v167
    %181 = vmatpush.msra.mxu0 %v166
    %182 = vmatpush.msra.mxu0 %v165
    %183 = vmatpush.msra.mxu0 %v164
    %184 = vmatpush.msra.mxu0 %v163
    %185 = vmatpush.msra.mxu0 %v162
    %186 = vmatpush.msra.mxu0 %v161
    %187 = vmatpush.msra.mxu0 %v160
    %188 = vmatpush.msra.mxu0 %v159
    %189 = vmatpush.msra.mxu0 %v158
    %190 = vmatpush.msra.mxu0 %v157
    %191 = vmatpush.msra.mxu0 %v156
    %192 = vmatmul.f32.gmra.mxu0 %v155
    %v193 = vpop.f32.mrf.mxu0
    %v194 = vadd.f32 %v174, %v193
    %195 = vdwg.mxu0
    %196 = vst [vmem:[%s7] sm:$0xff] %v194
    // Predicated region
    $region42: #{_dnn_forward_impl.1} parent=1 // pred_check
      _
    $region43: #{_dnn_forward_impl.1} parent=1 // pred_check_branch
      %198 = sbr.rel (0) target = $region45
    $region44: #{_dnn_forward_impl.1} parent=1 // pred_region
      _
    $region45: #{_dnn_forward_impl.1} parent=1 // pred_fallthru
      _
    // Predicated region
    $region46: #{_dnn_forward_impl.1} parent=1 // pred_check
      _
    $region47: #{_dnn_forward_impl.1} parent=1 // pred_check_branch
      %200 = sbr.rel (0) target = $region49
    $region48: #{_dnn_forward_impl.1} parent=1 // pred_region
      _
    $region49: #{_dnn_forward_impl.1} parent=1 // pred_fallthru
      _
    %201 = vsyncpa [#allocation3], 1
    %202 = vsyncpa [#allocation5], 1

</llo_original>
